<compile_context>
chip_gen: v5e
topology: v5e:2x2
jax: 0.10.0
libtpu: 0.0.40
codegen_flags: <defaults>
</compile_context>

<pallas_src>
import functools

import jax
import jax.numpy as jnp
from jax.experimental import pallas as pl
from jax.experimental.pallas import tpu as pltpu


def _round_up(x: int, m: int) -> int:
    return (x + m - 1) // m * m


def _box_head_kernel(x_ref, w6_ref, b6_ref, w7_ref, b7_ref, wp_ref, bp_ref,
                     feat_ref, pred_ref):
    """Fused fc6 -> ReLU -> fc7 -> ReLU -> [cls | bbox] for one (M, K) grid step.

    Grid = (m_tiles, k_tiles), K last / "arbitrary".  fc6 partial products are
    accumulated directly into feat_ref (f32, VMEM-resident across k); on the
    last K step the rest of the head runs on the fully reduced activations.
    """
    k = pl.program_id(1)

    @pl.when(k == 0)
    def _():
        feat_ref[...] = jnp.zeros_like(feat_ref)

    # fc6 partial product: bf16 MXU inputs, f32 accumulation.
    feat_ref[...] += jnp.dot(x_ref[...], w6_ref[...],
                             preferred_element_type=jnp.float32)

    @pl.when(k == pl.num_programs(1) - 1)
    def _():
        # fc6 epilogue (bias + ReLU), then fc7 and the fused predictor, all on
        # VMEM-resident data.
        h6 = jnp.maximum(feat_ref[...] + b6_ref[...], 0.0)
        h6 = h6.astype(w7_ref.dtype)                      # bf16 for the MXU
        h7 = jnp.dot(h6, w7_ref[...], preferred_element_type=jnp.float32)
        h7 = jnp.maximum(h7 + b7_ref[...], 0.0)
        feat_ref[...] = h7                                # BoxHeadFeatures
        pred_ref[...] = (
            jnp.dot(h7.astype(wp_ref.dtype), wp_ref[...],
                    preferred_element_type=jnp.float32)
            + bp_ref[...]
        )                                                 # [cls | bbox] fused


@functools.partial(jax.jit, static_argnames=("tm", "tk"))
def _box_head_pallas(x, w6, b6, w7, b7, wp, bp, *, tm, tk):
    """x: (Rp, Kp) bf16 (pre-padded).  Returns (feats f32 (Rp,H), preds f32 (Rp,Np))."""
    rp, kp = x.shape
    hidden = w6.shape[1]
    np_ = wp.shape[1]
    mt = rp // tm
    kt = kp // tk

    return pl.pallas_call(
        _box_head_kernel,
        out_shape=(
            jax.ShapeDtypeStruct((rp, hidden), jnp.float32),
            jax.ShapeDtypeStruct((rp, np_), jnp.float32),
        ),
        grid_spec=pltpu.PrefetchScalarGridSpec(
            num_scalar_prefetch=0,
            grid=(mt, kt),
            in_specs=[
                pl.BlockSpec((tm, tk), lambda i, k: (i, k)),          # x tile
                pl.BlockSpec((tk, hidden), lambda i, k: (k, 0)),      # w6 tile
                pl.BlockSpec((1, hidden), lambda i, k: (0, 0)),       # b6
                pl.BlockSpec((hidden, hidden), lambda i, k: (0, 0)),  # w7
                pl.BlockSpec((1, hidden), lambda i, k: (0, 0)),       # b7
                pl.BlockSpec((hidden, np_), lambda i, k: (0, 0)),     # [wc|wb] padded
                pl.BlockSpec((1, np_), lambda i, k: (0, 0)),          # [bc|bb] padded
            ],
            out_specs=(
                pl.BlockSpec((tm, hidden), lambda i, k: (i, 0)),      # h7 features
                pl.BlockSpec((tm, np_), lambda i, k: (i, 0)),         # fused preds
            ),
        ),
        compiler_params=pltpu.CompilerParams(
            dimension_semantics=("parallel", "arbitrary"),
            vmem_limit_bytes=32 * 1024 * 1024,
        ),
    )(x, w6, b6, w7, b7, wp, bp)


class ROIBoxHeadPallas:
    """Concrete ROIBoxHead forward (feature extractor + predictor) on TPU."""

    n_dim = 2  # 2D boxes -> 4 regression values per class

    def __init__(self, in_channels, pooled_hw, hidden_dim, num_classes, key,
                 *, tm=128, tk=512):
        assert hidden_dim % 128 == 0, "hidden_dim must be a multiple of 128"
        in_dim = in_channels * pooled_hw * pooled_hw
        k6, k7, kc, kb = jax.random.split(key, 4)
        s = 0.02

        # f32 master parameters (reference / training-style use).
        self.w6 = s * jax.random.normal(k6, (in_dim, hidden_dim), jnp.float32)
        self.b6 = jnp.zeros((hidden_dim,), jnp.float32)
        self.w7 = s * jax.random.normal(k7, (hidden_dim, hidden_dim), jnp.float32)
        self.b7 = jnp.zeros((hidden_dim,), jnp.float32)
        self.wc = s * jax.random.normal(kc, (hidden_dim, num_classes), jnp.float32)
        self.bc = jnp.zeros((num_classes,), jnp.float32)
        n_reg = num_classes * 2 * self.n_dim  # 4 per class in 2D
        self.wb = s * jax.random.normal(kb, (hidden_dim, n_reg), jnp.float32)
        self.bb = jnp.zeros((n_reg,), jnp.float32)

        self.in_dim = in_dim
        self.hidden_dim = hidden_dim
        self.num_classes = num_classes
        self.n_reg = n_reg
        self.tm_max = tm

        # ---- One-time kernel-side packing (hoisted out of forward) ---------
        # K tile: a multiple of 128, never larger than the (rounded) in_dim.
        self.tk = min(_round_up(tk, 128), _round_up(in_dim, 128))
        self.kp = _round_up(in_dim, self.tk)

        # fc6 weights: zero-pad K, cast to bf16 for the MXU.
        w6p = jnp.zeros((self.kp, hidden_dim), jnp.float32).at[:in_dim].set(self.w6)
        self._w6 = w6p.astype(jnp.bfloat16)
        self._b6 = self.b6.reshape(1, hidden_dim)

        self._w7 = self.w7.astype(jnp.bfloat16)
        self._b7 = self.b7.reshape(1, hidden_dim)

        # Fused lane-dense predictor: [cls | bbox] padded up to a multiple of 128.
        n_head = num_classes + n_reg
        self.np_ = _round_up(n_head, 128)
        wp = jnp.zeros((hidden_dim, self.np_), jnp.float32)
        wp = wp.at[:, :num_classes].set(self.wc)
        wp = wp.at[:, num_classes:n_head].set(self.wb)
        self._wp = wp.astype(jnp.bfloat16)
        bp = jnp.zeros((1, self.np_), jnp.float32)
        bp = bp.at[0, :num_classes].set(self.bc)
        bp = bp.at[0, num_classes:n_head].set(self.bb)
        self._bp = bp

    def forward(self, pooled_features):
        # pooled_features: (R, C, H, W) NCHW, already ROI-pooled.
        R = pooled_features.shape[0]
        x = pooled_features.reshape(R, -1).astype(jnp.bfloat16)    # (R, C*H*W)

        # Adaptive M tile: small ROI batches only pad to the next multiple of
        # 8 sublanes instead of a full 128-row tile.
        tm = min(self.tm_max, _round_up(max(R, 1), 8))
        rp = _round_up(max(R, 1), tm)
        x = jnp.pad(x, ((0, rp - R), (0, self.kp - self.in_dim)))

        feats, preds = _box_head_pallas(
            x, self._w6, self._b6, self._w7, self._b7, self._wp, self._bp,
            tm=tm, tk=self.tk)

        box_head_features = feats[:R]                                   # (R, hidden)
        class_logits = preds[:R, :self.num_classes]                     # (R, num_classes)
        box_regression = preds[:R, self.num_classes:self.num_classes + self.n_reg]
        return box_head_features, class_logits, box_regression


if __name__ == "__main__":
    key = jax.random.PRNGKey(0)
    k_feat, k_params = jax.random.split(key)

    # Small synthetic shapes: 16 ROIs, 4 channels, 8x8 pooled resolution.
    R, C, H, W = 16, 4, 8, 8
    hidden_dim = 128
    num_classes = 8

    pooled = jax.random.normal(k_feat, (R, C, H, W), jnp.float32)

    head = ROIBoxHeadPallas(
        in_channels=C, pooled_hw=H, hidden_dim=hidden_dim,
        num_classes=num_classes, key=k_params,
    )

    feats, cls_logits, bbox_reg = head.forward(pooled)
    jax.block_until_ready((feats, cls_logits, bbox_reg))

    # Reference in plain JAX, mirroring the kernel's bf16-input / f32-accum math.
    bf = jnp.bfloat16
    x = pooled.reshape(R, -1)
    h6 = jnp.maximum(
        jnp.dot(x.astype(bf), head.w6.astype(bf),
                preferred_element_type=jnp.float32) + head.b6, 0.0)
    h7 = jnp.maximum(
        jnp.dot(h6.astype(bf), head.w7.astype(bf),
                preferred_element_type=jnp.float32) + head.b7, 0.0)
    ref_cls = jnp.dot(h7.astype(bf), head.wc.astype(bf),
                      preferred_element_type=jnp.float32) + head.bc
    ref_box = jnp.dot(h7.astype(bf), head.wb.astype(bf),
                      preferred_element_type=jnp.float32) + head.bb

    assert feats.shape == (R, hidden_dim)
    assert cls_logits.shape == (R, num_classes)
    assert bbox_reg.shape == (R, num_classes * 4)
    assert jnp.allclose(feats, h7, atol=2e-3, rtol=2e-2)
    assert jnp.allclose(cls_logits, ref_cls, atol=2e-3, rtol=2e-2)
    assert jnp.allclose(bbox_reg, ref_box, atol=2e-3, rtol=2e-2)

    print("KERNEL_OK")
</pallas_src>

<mosaic_0001>
module attributes {stable_mosaic.version = 11 : i64} {
  func.func @_box_head_kernel(%arg0: i32, %arg1: i32, %arg2: memref<16x256xbf16, #tpu.memory_space<vmem>>, %arg3: memref<256x128xbf16, #tpu.memory_space<vmem>>, %arg4: memref<1x128xf32, #tpu.memory_space<vmem>>, %arg5: memref<128x128xbf16, #tpu.memory_space<vmem>>, %arg6: memref<1x128xf32, #tpu.memory_space<vmem>>, %arg7: memref<128x128xbf16, #tpu.memory_space<vmem>>, %arg8: memref<1x128xf32, #tpu.memory_space<vmem>>, %arg9: memref<16x128xf32, #tpu.memory_space<vmem>>, %arg10: memref<16x128xf32, #tpu.memory_space<vmem>>) attributes {dimension_semantics = [#tpu.dimension_semantics<parallel>, #tpu.dimension_semantics<arbitrary>], iteration_bounds = array<i64: 1, 1>, scalar_prefetch = 0 : i64, scratch_operands = 0 : i64, tpu.core_type = #tpu.core_type<tc>, window_params = [{transform_indices = @transform_0, window_bounds = array<i64: 16, 256>}, {transform_indices = @transform_1, window_bounds = array<i64: 256, 128>}, {pipeline_mode = #tpu.pipeline_mode<synchronous>, transform_indices = @transform_2, window_bounds = array<i64: 1, 128>}, {pipeline_mode = #tpu.pipeline_mode<synchronous>, transform_indices = @transform_3, window_bounds = array<i64: 128, 128>}, {pipeline_mode = #tpu.pipeline_mode<synchronous>, transform_indices = @transform_4, window_bounds = array<i64: 1, 128>}, {pipeline_mode = #tpu.pipeline_mode<synchronous>, transform_indices = @transform_5, window_bounds = array<i64: 128, 128>}, {pipeline_mode = #tpu.pipeline_mode<synchronous>, transform_indices = @transform_6, window_bounds = array<i64: 1, 128>}, {transform_indices = @transform_7, window_bounds = array<i64: 16, 128>}, {transform_indices = @transform_8, window_bounds = array<i64: 16, 128>}]} {
    %c0_i32 = arith.constant 0 : i32
    %0 = arith.cmpi eq, %arg1, %c0_i32 : i32
    %1 = arith.extui %0 : i1 to i32
    %c0_i32_0 = arith.constant 0 : i32
    %2 = arith.cmpi ne, %1, %c0_i32_0 : i32
    scf.if %2 {
      %cst_10 = arith.constant 0.000000e+00 : f32
      %12 = vector.broadcast %cst_10 : f32 to vector<16x128xf32>
      %c0_11 = arith.constant 0 : index
      %c0_12 = arith.constant 0 : index
      %13 = vector.load %arg9[%c0_11, %c0_12] : memref<16x128xf32, #tpu.memory_space<vmem>>, vector<16x128xf32>
      tpu.vector_store %arg9[%c0_11, %c0_12], %12 {strides = array<i32>} : memref<16x128xf32, #tpu.memory_space<vmem>>, vector<16x128xf32>,
    } else {
    }
    %c0 = arith.constant 0 : index
    %c0_1 = arith.constant 0 : index
    %3 = vector.load %arg9[%c0, %c0_1] : memref<16x128xf32, #tpu.memory_space<vmem>>, vector<16x128xf32>
    %c0_2 = arith.constant 0 : index
    %c0_3 = arith.constant 0 : index
    %4 = vector.load %arg2[%c0_2, %c0_3] : memref<16x256xbf16, #tpu.memory_space<vmem>>, vector<16x256xbf16>
    %c0_4 = arith.constant 0 : index
    %c0_5 = arith.constant 0 : index
    %5 = vector.load %arg3[%c0_4, %c0_5] : memref<256x128xbf16, #tpu.memory_space<vmem>>, vector<256x128xbf16>
    %cst = arith.constant dense<0.000000e+00> : vector<16x128xf32>
    %6 = tpu.matmul %4, %5, %cst {dimension_numbers = #tpu.dot_dimension_numbers<[1], [0], [0], [1], [0, 0, 1, 1], [], []>} : vector<16x256xbf16>, vector<256x128xbf16>, vector<16x128xf32> -> vector<16x128xf32>
    %7 = arith.addf %3, %6 : vector<16x128xf32>
    %c0_6 = arith.constant 0 : index
    %c0_7 = arith.constant 0 : index
    %8 = vector.load %arg9[%c0_6, %c0_7] : memref<16x128xf32, #tpu.memory_space<vmem>>, vector<16x128xf32>
    tpu.vector_store %arg9[%c0_6, %c0_7], %7 {strides = array<i32>} : memref<16x128xf32, #tpu.memory_space<vmem>>, vector<16x128xf32>,
    %c0_i32_8 = arith.constant 0 : i32
    %9 = arith.cmpi eq, %arg1, %c0_i32_8 : i32
    %10 = arith.extui %9 : i1 to i32
    %c0_i32_9 = arith.constant 0 : i32
    %11 = arith.cmpi ne, %10, %c0_i32_9 : i32
    scf.if %11 {
      %c0_10 = arith.constant 0 : index
      %c0_11 = arith.constant 0 : index
      %12 = vector.load %arg9[%c0_10, %c0_11] : memref<16x128xf32, #tpu.memory_space<vmem>>, vector<16x128xf32>
      %c0_12 = arith.constant 0 : index
      %c0_13 = arith.constant 0 : index
      %13 = vector.load %arg4[%c0_12, %c0_13] : memref<1x128xf32, #tpu.memory_space<vmem>>, vector<1x128xf32>
      %14 = vector.broadcast %13 : vector<1x128xf32> to vector<16x128xf32>
      %15 = arith.addf %12, %14 : vector<16x128xf32>
      %cst_14 = arith.constant 0.000000e+00 : f32
      %16 = vector.broadcast %cst_14 : f32 to vector<16x128xf32>
      %17 = arith.maximumf %15, %16 : vector<16x128xf32>
      %18 = arith.truncf %17 : vector<16x128xf32> to vector<16x128xbf16>
      %c0_15 = arith.constant 0 : index
      %c0_16 = arith.constant 0 : index
      %19 = vector.load %arg5[%c0_15, %c0_16] : memref<128x128xbf16, #tpu.memory_space<vmem>>, vector<128x128xbf16>
      %cst_17 = arith.constant dense<0.000000e+00> : vector<16x128xf32>
      %20 = tpu.matmul %18, %19, %cst_17 {dimension_numbers = #tpu.dot_dimension_numbers<[1], [0], [0], [1], [0, 0, 1, 1], [], []>} : vector<16x128xbf16>, vector<128x128xbf16>, vector<16x128xf32> -> vector<16x128xf32>
      %c0_18 = arith.constant 0 : index
      %c0_19 = arith.constant 0 : index
      %21 = vector.load %arg6[%c0_18, %c0_19] : memref<1x128xf32, #tpu.memory_space<vmem>>, vector<1x128xf32>
      %22 = vector.broadcast %21 : vector<1x128xf32> to vector<16x128xf32>
      %23 = arith.addf %20, %22 : vector<16x128xf32>
      %cst_20 = arith.constant 0.000000e+00 : f32
      %24 = vector.broadcast %cst_20 : f32 to vector<16x128xf32>
      %25 = arith.maximumf %23, %24 : vector<16x128xf32>
      %c0_21 = arith.constant 0 : index
      %c0_22 = arith.constant 0 : index
      %26 = vector.load %arg9[%c0_21, %c0_22] : memref<16x128xf32, #tpu.memory_space<vmem>>, vector<16x128xf32>
      tpu.vector_store %arg9[%c0_21, %c0_22], %25 {strides = array<i32>} : memref<16x128xf32, #tpu.memory_space<vmem>>, vector<16x128xf32>,
      %27 = arith.truncf %25 : vector<16x128xf32> to vector<16x128xbf16>
      %c0_23 = arith.constant 0 : index
      %c0_24 = arith.constant 0 : index
      %28 = vector.load %arg7[%c0_23, %c0_24] : memref<128x128xbf16, #tpu.memory_space<vmem>>, vector<128x128xbf16>
      %cst_25 = arith.constant dense<0.000000e+00> : vector<16x128xf32>
      %29 = tpu.matmul %27, %28, %cst_25 {dimension_numbers = #tpu.dot_dimension_numbers<[1], [0], [0], [1], [0, 0, 1, 1], [], []>} : vector<16x128xbf16>, vector<128x128xbf16>, vector<16x128xf32> -> vector<16x128xf32>
      %c0_26 = arith.constant 0 : index
      %c0_27 = arith.constant 0 : index
      %30 = vector.load %arg8[%c0_26, %c0_27] : memref<1x128xf32, #tpu.memory_space<vmem>>, vector<1x128xf32>
      %31 = vector.broadcast %30 : vector<1x128xf32> to vector<16x128xf32>
      %32 = arith.addf %29, %31 : vector<16x128xf32>
      %c0_28 = arith.constant 0 : index
      %c0_29 = arith.constant 0 : index
      %33 = vector.load %arg10[%c0_28, %c0_29] : memref<16x128xf32, #tpu.memory_space<vmem>>, vector<16x128xf32>
      tpu.vector_store %arg10[%c0_28, %c0_29], %32 {strides = array<i32>} : memref<16x128xf32, #tpu.memory_space<vmem>>, vector<16x128xf32>,
    } else {
    }
    return
  }
  func.func @transform_0(%arg0: i32, %arg1: i32) -> (i32, i32) {
    %c0_i32 = arith.constant 0 : i32
    return %arg0, %arg1 : i32, i32
  }
  func.func @transform_1(%arg0: i32, %arg1: i32) -> (i32, i32) {
    %c0_i32 = arith.constant 0 : i32
    %c0_i32_0 = arith.constant 0 : i32
    return %arg1, %c0_i32 : i32, i32
  }
  func.func @transform_2(%arg0: i32, %arg1: i32) -> (i32, i32) {
    %c0_i32 = arith.constant 0 : i32
    %c0_i32_0 = arith.constant 0 : i32
    %c0_i32_1 = arith.constant 0 : i32
    return %c0_i32, %c0_i32_0 : i32, i32
  }
  func.func @transform_3(%arg0: i32, %arg1: i32) -> (i32, i32) {
    %c0_i32 = arith.constant 0 : i32
    %c0_i32_0 = arith.constant 0 : i32
    %c0_i32_1 = arith.constant 0 : i32
    return %c0_i32, %c0_i32_0 : i32, i32
  }
  func.func @transform_4(%arg0: i32, %arg1: i32) -> (i32, i32) {
    %c0_i32 = arith.constant 0 : i32
    %c0_i32_0 = arith.constant 0 : i32
    %c0_i32_1 = arith.constant 0 : i32
    return %c0_i32, %c0_i32_0 : i32, i32
  }
  func.func @transform_5(%arg0: i32, %arg1: i32) -> (i32, i32) {
    %c0_i32 = arith.constant 0 : i32
    %c0_i32_0 = arith.constant 0 : i32
    %c0_i32_1 = arith.constant 0 : i32
    return %c0_i32, %c0_i32_0 : i32, i32
  }
  func.func @transform_6(%arg0: i32, %arg1: i32) -> (i32, i32) {
    %c0_i32 = arith.constant 0 : i32
    %c0_i32_0 = arith.constant 0 : i32
    %c0_i32_1 = arith.constant 0 : i32
    return %c0_i32, %c0_i32_0 : i32, i32
  }
  func.func @transform_7(%arg0: i32, %arg1: i32) -> (i32, i32) {
    %c0_i32 = arith.constant 0 : i32
    %c0_i32_0 = arith.constant 0 : i32
    return %arg0, %c0_i32 : i32, i32
  }
  func.func @transform_8(%arg0: i32, %arg1: i32) -> (i32, i32) {
    %c0_i32 = arith.constant 0 : i32
    %c0_i32_0 = arith.constant 0 : i32
    return %arg0, %c0_i32 : i32, i32
  }
}

</mosaic_0001>

<llo_original>
// kernel: _box_head_pallas.1
$region0: #{_box_head_pallas.1}
  #allocation0 [shape = 'u32[]', space=smem, size = 0x4, offset = 0x4, fixed_abs, tag = 'smem constant byte address 0x4 - core index']
  #allocation1 [shape = 'u32[72,128]{1,0:T(1,128)}', space=vmem, size = 0x9000, scoped, tag = 'internal scratch']
  %s0 = inlined_call_operand.hbm [shape: bf16[16,256], index: 0, kind: input, shape index: {}]
  %s1 = inlined_call_operand.hbm [shape: bf16[256,128], index: 1, kind: input, shape index: {}]
  %s2 = inlined_call_operand.vmem [shape: f32[1,128], index: 2, kind: input, shape index: {}]
  %s3 = inlined_call_operand.hbm [shape: bf16[128,128], index: 3, kind: input, shape index: {}]
  %s4 = inlined_call_operand.vmem [shape: f32[1,128], index: 4, kind: input, shape index: {}]
  %s5 = inlined_call_operand.hbm [shape: bf16[128,128], index: 5, kind: input, shape index: {}]
  %s6 = inlined_call_operand.vmem [shape: f32[1,128], index: 6, kind: input, shape index: {}]
  %s7 = inlined_call_operand.hbm [shape: f32[16,128], index: 7, kind: output, shape index: {0}]
  %s8 = inlined_call_operand.hbm [shape: f32[16,128], index: 8, kind: output, shape index: {1}]
  %9 = xla_tuple %s7, %s8
  %s10 = sld [smem:[#allocation0]]
  $region70: #{_box_head_pallas.1} parent=0
    _
  %s12 = ssub.s32 1, %s10
  %s13 = scalar_select 0, %s12, %s10
  $region1: #{_box_head_pallas.1} parent=0
    #allocation2 [shape = 'u8[8192]{0}', space=vmem, size = 0x2000, scoped, tag = 'input window, operand 0, single buffered']
    #allocation3 [shape = 's32[1]{0}', space=sflag, size = 0x4, scoped, tag = 'scoped memory for _box_head_pallas.1']
    #allocation4 [shape = 's32[1]{0}', space=sflag, size = 0x4, scoped, tag = 'scoped memory for _box_head_pallas.1']
    #allocation5 [shape = 'u8[65536]{0}', space=vmem, size = 0x10000, scoped, tag = 'input window, operand 1, single buffered']
    #allocation6 [shape = 's32[1]{0}', space=sflag, size = 0x4, scoped, tag = 'scoped memory for _box_head_pallas.1']
    #allocation7 [shape = 'u8[32768]{0}', space=vmem, size = 0x8000, scoped, tag = 'input window, operand 3, single buffered']
    #allocation8 [shape = 'u8[32768]{0}', space=vmem, size = 0x8000, scoped, tag = 'input window, operand 5, single buffered']
    #allocation9 [shape = 's32[1]{0}', space=sflag, size = 0x4, scoped, tag = 'scoped memory for _box_head_pallas.1']
    #allocation10 [shape = 'u8[8192]{0}', space=vmem, size = 0x2000, scoped, tag = 'output window, operand 0, single buffered']
    #allocation11 [shape = 'u8[8192]{0}', space=vmem, size = 0x2000, scoped, tag = 'output window, operand 1, single buffered']
    #allocation12 [shape = 's32[1]{0}', space=sflag, size = 0x4, scoped, tag = 'scoped memory for _box_head_pallas.1']
    %14 = vsyncpa [#allocation3], 0
    %15 = vsyncpa [#allocation6], 0
    %16 = vsyncpa [#allocation9], 0
    %17 = vsyncpa [#allocation4], 0
    %18 = vsyncpa [#allocation12], 0
    // Predicated region
    $region2: #{_box_head_pallas.1} parent=1 // pred_check
      _
    $region3: #{_box_head_pallas.1} parent=1 // pred_check_branch
      %20 = sbr.rel (0) target = $region5
    $region4: #{_box_head_pallas.1} parent=1 // pred_region
      %22 = vsyncadd [#allocation3], 0
      %s23 = sshll.u32 %s0, 4
      %s24 = int_to_ptr.hbm [resolvable:$true] %s23
      %s25 = sshll.u32 [#allocation2], 4
      %s26 = int_to_ptr.vmem [resolvable:$true] %s25
      %31 = dma.hbm_to_vmem [thread:$0]  %s24, 256, %s26, [#allocation3], 128, 128, 8
    $region5: #{_box_head_pallas.1} parent=1 // pred_fallthru
      _
    // Predicated region
    $region6: #{_box_head_pallas.1} parent=1 // pred_check
      _
    $region7: #{_box_head_pallas.1} parent=1 // pred_check_branch
      %33 = sbr.rel (0) target = $region9
    $region8: #{_box_head_pallas.1} parent=1 // pred_region
      %35 = vsyncadd [#allocation6], 0
      %s36 = sshll.u32 %s1, 4
      %s37 = int_to_ptr.hbm [resolvable:$true] %s36
      %s38 = sshll.u32 [#allocation5], 4
      %s39 = int_to_ptr.vmem [resolvable:$true] %s38
      %44 = dma.hbm_to_vmem [thread:$0]  %s37, 2048, %s39, [#allocation6], 64, 64, 4
    $region9: #{_box_head_pallas.1} parent=1 // pred_fallthru
      _
    // Predicated region
    $region10: #{_box_head_pallas.1} parent=1 // pred_check
      _
    $region11: #{_box_head_pallas.1} parent=1 // pred_check_branch
      %46 = sbr.rel (0) target = $region13
    $region12: #{_box_head_pallas.1} parent=1 // pred_region
      _
    $region13: #{_box_head_pallas.1} parent=1 // pred_fallthru
      _
    // Predicated region
    $region14: #{_box_head_pallas.1} parent=1 // pred_check
      _
    $region15: #{_box_head_pallas.1} parent=1 // pred_check_branch
      %48 = sbr.rel (0) target = $region17
    $region16: #{_box_head_pallas.1} parent=1 // pred_region
      %50 = vsyncadd [#allocation6], 0
      %s51 = sshll.u32 %s3, 4
      %s52 = int_to_ptr.hbm [resolvable:$true] %s51
      %s53 = sshll.u32 [#allocation7], 4
      %s54 = int_to_ptr.vmem [resolvable:$true] %s53
      %59 = dma.hbm_to_vmem [thread:$0]  %s52, 1024, %s54, [#allocation6], 64, 64, 4
    $region17: #{_box_head_pallas.1} parent=1 // pred_fallthru
      _
    // Predicated region
    $region18: #{_box_head_pallas.1} parent=1 // pred_check
      _
    $region19: #{_box_head_pallas.1} parent=1 // pred_check_branch
      %61 = sbr.rel (0) target = $region21
    $region20: #{_box_head_pallas.1} parent=1 // pred_region
      _
    $region21: #{_box_head_pallas.1} parent=1 // pred_fallthru
      _
    // Predicated region
    $region22: #{_box_head_pallas.1} parent=1 // pred_check
      _
    $region23: #{_box_head_pallas.1} parent=1 // pred_check_branch
      %63 = sbr.rel (0) target = $region25
    $region24: #{_box_head_pallas.1} parent=1 // pred_region
      %65 = vsyncadd [#allocation9], 0
      %s66 = sshll.u32 %s5, 4
      %s67 = int_to_ptr.hbm [resolvable:$true] %s66
      %s68 = sshll.u32 [#allocation8], 4
      %s69 = int_to_ptr.vmem [resolvable:$true] %s68
      %74 = dma.hbm_to_vmem [thread:$0]  %s67, 1024, %s69, [#allocation9], 64, 64, 4
    $region25: #{_box_head_pallas.1} parent=1 // pred_fallthru
      _
    // Predicated region
    $region26: #{_box_head_pallas.1} parent=1 // pred_check
      _
    $region27: #{_box_head_pallas.1} parent=1 // pred_check_branch
      %76 = sbr.rel (0) target = $region29
    $region28: #{_box_head_pallas.1} parent=1 // pred_region
      _
    $region29: #{_box_head_pallas.1} parent=1 // pred_fallthru
      _
    // Predicated region
    $region30: #{_box_head_pallas.1} parent=1 // pred_check
      _
    $region31: #{_box_head_pallas.1} parent=1 // pred_check_branch
      %78 = sbr.rel (0) target = $region33
    $region32: #{_box_head_pallas.1} parent=1 // pred_region
      %80 = dma.done [#allocation3], 256
    $region33: #{_box_head_pallas.1} parent=1 // pred_fallthru
      _
    // Predicated region
    $region34: #{_box_head_pallas.1} parent=1 // pred_check
      _
    $region35: #{_box_head_pallas.1} parent=1 // pred_check_branch
      %82 = sbr.rel (0) target = $region37
    $region36: #{_box_head_pallas.1} parent=1 // pred_region
      %84 = dma.done [#allocation6], 2048
    $region37: #{_box_head_pallas.1} parent=1 // pred_fallthru
      _
    // Predicated region
    $region38: #{_box_head_pallas.1} parent=1 // pred_check
      _
    $region39: #{_box_head_pallas.1} parent=1 // pred_check_branch
      %86 = sbr.rel (0) target = $region41
    $region40: #{_box_head_pallas.1} parent=1 // pred_region
      %88 = dma.done [#allocation6], 1024
    $region41: #{_box_head_pallas.1} parent=1 // pred_fallthru
      _
    // Predicated region
    $region42: #{_box_head_pallas.1} parent=1 // pred_check
      _
    $region43: #{_box_head_pallas.1} parent=1 // pred_check_branch
      %90 = sbr.rel (0) target = $region45
    $region44: #{_box_head_pallas.1} parent=1 // pred_region
      %92 = dma.done [#allocation9], 1024
    $region45: #{_box_head_pallas.1} parent=1 // pred_fallthru
      _
    %p93 = scmp.eq.s32.totalorder 0, 0
    // Predicated region
    $region46: #{_box_head_pallas.1} parent=1 // pred_check
      %p94 = pneg %p93
    $region47: #{_box_head_pallas.1} parent=1 // pred_check_branch
      %96 = sbr.rel (%p94) target = $region49
    $region48: #{_box_head_pallas.1} parent=1 // pred_region
      %97 = vst [vmem:[#allocation10] sm:$0xff] 0.0
      %98 = vst [vmem:[#allocation10 + $0x8] sm:$0xff] 0.0
    $region49: #{_box_head_pallas.1} parent=1 // pred_fallthru
      _
    %v99 = vld [vmem:[#allocation10] sm:$0xff]
    %v100 = vld [vmem:[#allocation10 + $0x8] sm:$0xff]
    %v101 = vld [vmem:[#allocation2] sm:$0xff]
    %v102 = vld [vmem:[#allocation2 + $0x8] sm:$0xff]
    %v103 = vld [vmem:[#allocation5] sm:$0xf]
    %v104 = vld [vmem:[#allocation5 + $0x4] sm:$0xf]
    %v105 = vld [vmem:[#allocation5 + $0x8] sm:$0xf]
    %v106 = vld [vmem:[#allocation5 + $0xc] sm:$0xf]
    %v107 = vld [vmem:[#allocation5 + $0x10] sm:$0xf]
    %v108 = vld [vmem:[#allocation5 + $0x14] sm:$0xf]
    %v109 = vld [vmem:[#allocation5 + $0x18] sm:$0xf]
    %v110 = vld [vmem:[#allocation5 + $0x1c] sm:$0xf]
    %v111 = vld [vmem:[#allocation5 + $0x20] sm:$0xf]
    %v112 = vld [vmem:[#allocation5 + $0x24] sm:$0xf]
    %v113 = vld [vmem:[#allocation5 + $0x28] sm:$0xf]
    %v114 = vld [vmem:[#allocation5 + $0x2c] sm:$0xf]
    %v115 = vld [vmem:[#allocation5 + $0x30] sm:$0xf]
    %v116 = vld [vmem:[#allocation5 + $0x34] sm:$0xf]
    %v117 = vld [vmem:[#allocation5 + $0x38] sm:$0xf]
    %v118 = vld [vmem:[#allocation5 + $0x3c] sm:$0xf]
    %v119 = vld [vmem:[#allocation5 + $0x40] sm:$0xf]
    %v120 = vld [vmem:[#allocation5 + $0x44] sm:$0xf]
    %v121 = vld [vmem:[#allocation5 + $0x48] sm:$0xf]
    %v122 = vld [vmem:[#allocation5 + $0x4c] sm:$0xf]
    %v123 = vld [vmem:[#allocation5 + $0x50] sm:$0xf]
    %v124 = vld [vmem:[#allocation5 + $0x54] sm:$0xf]
    %v125 = vld [vmem:[#allocation5 + $0x58] sm:$0xf]
    %v126 = vld [vmem:[#allocation5 + $0x5c] sm:$0xf]
    %v127 = vld [vmem:[#allocation5 + $0x60] sm:$0xf]
    %v128 = vld [vmem:[#allocation5 + $0x64] sm:$0xf]
    %v129 = vld [vmem:[#allocation5 + $0x68] sm:$0xf]
    %v130 = vld [vmem:[#allocation5 + $0x6c] sm:$0xf]
    %v131 = vld [vmem:[#allocation5 + $0x70] sm:$0xf]
    %v132 = vld [vmem:[#allocation5 + $0x74] sm:$0xf]
    %v133 = vld [vmem:[#allocation5 + $0x78] sm:$0xf]
    %v134 = vld [vmem:[#allocation5 + $0x7c] sm:$0xf]
    %v137 = vunpack.c.l.b16 %v101
    %v138 = vunpack.c.h.b16 %v101
    %v139 = vunpack.c.l.b16 %v102
    %v140 = vunpack.c.h.b16 %v102
    %v141 = vpack.c.b16 %v139, %v137
    %v142 = vpack.c.b16 %v140, %v138
    %v177 = vunpack.c.l.b16 %v103
    %v178 = vunpack.c.l.b16 %v104
    %v179 = vunpack.c.l.b16 %v105
    %v180 = vunpack.c.l.b16 %v106
    %v181 = vunpack.c.l.b16 %v107
    %v182 = vunpack.c.l.b16 %v108
    %v183 = vunpack.c.l.b16 %v109
    %v184 = vunpack.c.l.b16 %v110
    %v185 = vunpack.c.l.b16 %v111
    %v186 = vunpack.c.l.b16 %v112
    %v187 = vunpack.c.l.b16 %v113
    %v188 = vunpack.c.l.b16 %v114
    %v189 = vunpack.c.l.b16 %v115
    %v190 = vunpack.c.l.b16 %v116
    %v191 = vunpack.c.l.b16 %v117
    %v192 = vunpack.c.l.b16 %v118
    %v193 = vunpack.c.l.b16 %v119
    %v194 = vunpack.c.l.b16 %v120
    %v195 = vunpack.c.l.b16 %v121
    %v196 = vunpack.c.l.b16 %v122
    %v197 = vunpack.c.l.b16 %v123
    %v198 = vunpack.c.l.b16 %v124
    %v199 = vunpack.c.l.b16 %v125
    %v200 = vunpack.c.l.b16 %v126
    %v201 = vunpack.c.l.b16 %v127
    %v202 = vunpack.c.l.b16 %v128
    %v203 = vunpack.c.l.b16 %v129
    %v204 = vunpack.c.l.b16 %v130
    %v205 = vunpack.c.l.b16 %v131
    %v206 = vunpack.c.l.b16 %v132
    %v207 = vunpack.c.l.b16 %v133
    %v208 = vunpack.c.l.b16 %v134
    %v209 = vpack.c.b16 %v178, %v177
    %v210 = vpack.c.b16 %v180, %v179
    %v211 = vpack.c.b16 %v182, %v181
    %v212 = vpack.c.b16 %v184, %v183
    %v213 = vpack.c.b16 %v186, %v185
    %v214 = vpack.c.b16 %v188, %v187
    %v215 = vpack.c.b16 %v190, %v189
    %v216 = vpack.c.b16 %v192, %v191
    %v217 = vpack.c.b16 %v194, %v193
    %v218 = vpack.c.b16 %v196, %v195
    %v219 = vpack.c.b16 %v198, %v197
    %v220 = vpack.c.b16 %v200, %v199
    %v221 = vpack.c.b16 %v202, %v201
    %v222 = vpack.c.b16 %v204, %v203
    %v223 = vpack.c.b16 %v206, %v205
    %v224 = vpack.c.b16 %v208, %v207
    %241 = vmatpush.bf16.msra.mxu0 %v216
    %242 = vmatpush.bf16.msra.mxu0 %v215
    %243 = vmatpush.bf16.msra.mxu0 %v214
    %244 = vmatpush.bf16.msra.mxu0 %v213
    %245 = vmatpush.bf16.msra.mxu0 %v212
    %246 = vmatpush.bf16.msra.mxu0 %v211
    %247 = vmatpush.bf16.msra.mxu0 %v210
    %248 = vmatpush.bf16.msra.mxu0 %v209
    %249 = vmatmul.bf16.gmra.mxu0 %v141
    %v250 = vpop.f32.mrf.mxu0
    %v251 = vadd.f32 0.0, %v250
    %v252 = vpop.f32.mrf.mxu0
    %v253 = vadd.f32 0.0, %v252
    %254 = vdwg.mxu0
    %255 = vmatpush.bf16.msra.mxu0 %v224
    %256 = vmatpush.bf16.msra.mxu0 %v223
    %257 = vmatpush.bf16.msra.mxu0 %v222
    %258 = vmatpush.bf16.msra.mxu0 %v221
    %259 = vmatpush.bf16.msra.mxu0 %v220
    %260 = vmatpush.bf16.msra.mxu0 %v219
    %261 = vmatpush.bf16.msra.mxu0 %v218
    %262 = vmatpush.bf16.msra.mxu0 %v217
    %263 = vmatmul.bf16.gmra.mxu0 %v142
    %v264 = vpop.f32.mrf.mxu0
    %v265 = vadd.f32 %v251, %v264
    %v266 = vpop.f32.mrf.mxu0
    %v267 = vadd.f32 %v253, %v266
    %268 = vdwg.mxu0
    %v269 = vadd.f32 %v99, %v265
    %v270 = vadd.f32 %v100, %v267
    %271 = vst [vmem:[#allocation10] sm:$0xff] %v269
    %272 = vst [vmem:[#allocation10 + $0x8] sm:$0xff] %v270
    // Predicated region
    $region50: #{_box_head_pallas.1} parent=1 // pred_check
      %p273 = pneg %p93
    $region51: #{_box_head_pallas.1} parent=1 // pred_check_branch
      %275 = sbr.rel (%p273) target = $region53
    $region52: #{_box_head_pallas.1} parent=1 // pred_region
      %v276 = vld [vmem:[#allocation10] sm:$0xff]
      %v277 = vld [vmem:[#allocation10 + $0x8] sm:$0xff]
      %v278 = vld [vmem:[%s2] sm:$0x1]
      %v280 = vperm.slane %v278, 0
      %v282 = vadd.f32 %v276, %v280
      %v283 = vadd.f32 %v277, %v280
      %v284 = vmax.f32 %v282, 0.0
      %v285 = vmax.f32 %v283, 0.0
      %v286 = vpack.c.bf16 %v285, %v284
      %v287 = vld [vmem:[#allocation7] sm:$0xf]
      %v288 = vld [vmem:[#allocation7 + $0x4] sm:$0xf]
      %v289 = vld [vmem:[#allocation7 + $0x8] sm:$0xf]
      %v290 = vld [vmem:[#allocation7 + $0xc] sm:$0xf]
      %v291 = vld [vmem:[#allocation7 + $0x10] sm:$0xf]
      %v292 = vld [vmem:[#allocation7 + $0x14] sm:$0xf]
      %v293 = vld [vmem:[#allocation7 + $0x18] sm:$0xf]
      %v294 = vld [vmem:[#allocation7 + $0x1c] sm:$0xf]
      %v295 = vld [vmem:[#allocation7 + $0x20] sm:$0xf]
      %v296 = vld [vmem:[#allocation7 + $0x24] sm:$0xf]
      %v297 = vld [vmem:[#allocation7 + $0x28] sm:$0xf]
      %v298 = vld [vmem:[#allocation7 + $0x2c] sm:$0xf]
      %v299 = vld [vmem:[#allocation7 + $0x30] sm:$0xf]
      %v300 = vld [vmem:[#allocation7 + $0x34] sm:$0xf]
      %v301 = vld [vmem:[#allocation7 + $0x38] sm:$0xf]
      %v302 = vld [vmem:[#allocation7 + $0x3c] sm:$0xf]
      %v303 = vld [vmem:[%s4] sm:$0x1]
      %v305 = vperm.slane %v303, 0
      %v323 = vunpack.c.l.b16 %v287
      %v324 = vunpack.c.l.b16 %v288
      %v325 = vunpack.c.l.b16 %v289
      %v326 = vunpack.c.l.b16 %v290
      %v327 = vunpack.c.l.b16 %v291
      %v328 = vunpack.c.l.b16 %v292
      %v329 = vunpack.c.l.b16 %v293
      %v330 = vunpack.c.l.b16 %v294
      %v331 = vunpack.c.l.b16 %v295
      %v332 = vunpack.c.l.b16 %v296
      %v333 = vunpack.c.l.b16 %v297
      %v334 = vunpack.c.l.b16 %v298
      %v335 = vunpack.c.l.b16 %v299
      %v336 = vunpack.c.l.b16 %v300
      %v337 = vunpack.c.l.b16 %v301
      %v338 = vunpack.c.l.b16 %v302
      %v339 = vpack.c.b16 %v324, %v323
      %v340 = vpack.c.b16 %v326, %v325
      %v341 = vpack.c.b16 %v328, %v327
      %v342 = vpack.c.b16 %v330, %v329
      %v343 = vpack.c.b16 %v332, %v331
      %v344 = vpack.c.b16 %v334, %v333
      %v345 = vpack.c.b16 %v336, %v335
      %v346 = vpack.c.b16 %v338, %v337
      %355 = vmatpush.bf16.msra.mxu0 %v346
      %356 = vmatpush.bf16.msra.mxu0 %v345
      %357 = vmatpush.bf16.msra.mxu0 %v344
      %358 = vmatpush.bf16.msra.mxu0 %v343
      %359 = vmatpush.bf16.msra.mxu0 %v342
      %360 = vmatpush.bf16.msra.mxu0 %v341
      %361 = vmatpush.bf16.msra.mxu0 %v340
      %362 = vmatpush.bf16.msra.mxu0 %v339
      %363 = vmatmul.bf16.gmra.mxu0 %v286
      %v364 = vpop.f32.mrf.mxu0
      %v365 = vadd.f32 %v305, %v364
      %v366 = vpop.f32.mrf.mxu0
      %v367 = vadd.f32 %v305, %v366
      %368 = vdwg.mxu0
      %v369 = vmax.f32 %v365, 0.0
      %v370 = vmax.f32 %v367, 0.0
      %371 = vst [vmem:[#allocation10] sm:$0xff] %v369
      %372 = vst [vmem:[#allocation10 + $0x8] sm:$0xff] %v370
      %v373 = vpack.c.bf16 %v370, %v369
      %v374 = vld [vmem:[#allocation8] sm:$0xf]
      %v375 = vld [vmem:[#allocation8 + $0x4] sm:$0xf]
      %v376 = vld [vmem:[#allocation8 + $0x8] sm:$0xf]
      %v377 = vld [vmem:[#allocation8 + $0xc] sm:$0xf]
      %v378 = vld [vmem:[#allocation8 + $0x10] sm:$0xf]
      %v379 = vld [vmem:[#allocation8 + $0x14] sm:$0xf]
      %v380 = vld [vmem:[#allocation8 + $0x18] sm:$0xf]
      %v381 = vld [vmem:[#allocation8 + $0x1c] sm:$0xf]
      %v382 = vld [vmem:[#allocation8 + $0x20] sm:$0xf]
      %v383 = vld [vmem:[#allocation8 + $0x24] sm:$0xf]
      %v384 = vld [vmem:[#allocation8 + $0x28] sm:$0xf]
      %v385 = vld [vmem:[#allocation8 + $0x2c] sm:$0xf]
      %v386 = vld [vmem:[#allocation8 + $0x30] sm:$0xf]
      %v387 = vld [vmem:[#allocation8 + $0x34] sm:$0xf]
      %v388 = vld [vmem:[#allocation8 + $0x38] sm:$0xf]
      %v389 = vld [vmem:[#allocation8 + $0x3c] sm:$0xf]
      %v390 = vld [vmem:[%s6] sm:$0x1]
      %v392 = vperm.slane %v390, 0
      %v410 = vunpack.c.l.b16 %v374
      %v411 = vunpack.c.l.b16 %v375
      %v412 = vunpack.c.l.b16 %v376
      %v413 = vunpack.c.l.b16 %v377
      %v414 = vunpack.c.l.b16 %v378
      %v415 = vunpack.c.l.b16 %v379
      %v416 = vunpack.c.l.b16 %v380
      %v417 = vunpack.c.l.b16 %v381
      %v418 = vunpack.c.l.b16 %v382
      %v419 = vunpack.c.l.b16 %v383
      %v420 = vunpack.c.l.b16 %v384
      %v421 = vunpack.c.l.b16 %v385
      %v422 = vunpack.c.l.b16 %v386
      %v423 = vunpack.c.l.b16 %v387
      %v424 = vunpack.c.l.b16 %v388
      %v425 = vunpack.c.l.b16 %v389
      %v426 = vpack.c.b16 %v411, %v410
      %v427 = vpack.c.b16 %v413, %v412
      %v428 = vpack.c.b16 %v415, %v414
      %v429 = vpack.c.b16 %v417, %v416
      %v430 = vpack.c.b16 %v419, %v418
      %v431 = vpack.c.b16 %v421, %v420
      %v432 = vpack.c.b16 %v423, %v422
      %v433 = vpack.c.b16 %v425, %v424
      %442 = vmatpush.bf16.msra.mxu0 %v433
      %443 = vmatpush.bf16.msra.mxu0 %v432
      %444 = vmatpush.bf16.msra.mxu0 %v431
      %445 = vmatpush.bf16.msra.mxu0 %v430
      %446 = vmatpush.bf16.msra.mxu0 %v429
      %447 = vmatpush.bf16.msra.mxu0 %v428
      %448 = vmatpush.bf16.msra.mxu0 %v427
      %449 = vmatpush.bf16.msra.mxu0 %v426
      %450 = vmatmul.bf16.gmra.mxu0 %v373
      %v451 = vpop.f32.mrf.mxu0
      %v452 = vadd.f32 %v392, %v451
      %v453 = vpop.f32.mrf.mxu0
      %v454 = vadd.f32 %v392, %v453
      %455 = vdwg.mxu0
      %456 = vst [vmem:[#allocation11] sm:$0xff] %v452
      %457 = vst [vmem:[#allocation11 + $0x8] sm:$0xff] %v454
    $region53: #{_box_head_pallas.1} parent=1 // pred_fallthru
      _
    // Predicated region
    $region54: #{_box_head_pallas.1} parent=1 // pred_check
      _
    $region55: #{_box_head_pallas.1} parent=1 // pred_check_branch
      %459 = sbr.rel (0) target = $region57
    $region56: #{_box_head_pallas.1} parent=1 // pred_region
      %461 = vsyncadd [#allocation4], 0
      %s462 = sshll.u32 [#allocation10], 4
      %s463 = int_to_ptr.vmem [resolvable:$true] %s462
      %s464 = sshll.u32 %s7, 4
      %s465 = int_to_ptr.hbm [resolvable:$true] %s464
      %470 = dma.vmem_to_hbm [thread:$0]  %s463, 256, %s465, [#allocation4], 128, 128, 8
    $region57: #{_box_head_pallas.1} parent=1 // pred_fallthru
      _
    // Predicated region
    $region58: #{_box_head_pallas.1} parent=1 // pred_check
      _
    $region59: #{_box_head_pallas.1} parent=1 // pred_check_branch
      %472 = sbr.rel (0) target = $region61
    $region60: #{_box_head_pallas.1} parent=1 // pred_region
      %474 = vsyncadd [#allocation12], 0
      %s475 = sshll.u32 [#allocation11], 4
      %s476 = int_to_ptr.vmem [resolvable:$true] %s475
      %s477 = sshll.u32 %s8, 4
      %s478 = int_to_ptr.hbm [resolvable:$true] %s477
      %483 = dma.vmem_to_hbm [thread:$0]  %s476, 256, %s478, [#allocation12], 128, 128, 8
    $region61: #{_box_head_pallas.1} parent=1 // pred_fallthru
      _
    // Predicated region
    $region62: #{_box_head_pallas.1} parent=1 // pred_check
      _
    $region63: #{_box_head_pallas.1} parent=1 // pred_check_branch
      %485 = sbr.rel (0) target = $region65
    $region64: #{_box_head_pallas.1} parent=1 // pred_region
      %487 = dma.done [#allocation4], 256
    $region65: #{_box_head_pallas.1} parent=1 // pred_fallthru
      _
    // Predicated region
    $region66: #{_box_head_pallas.1} parent=1 // pred_check
      _
    $region67: #{_box_head_pallas.1} parent=1 // pred_check_branch
      %489 = sbr.rel (0) target = $region69
    $region68: #{_box_head_pallas.1} parent=1 // pred_region
      %491 = dma.done [#allocation12], 256
    $region69: #{_box_head_pallas.1} parent=1 // pred_fallthru
      _
    %492 = vsyncpa [#allocation3], 1
    %493 = vsyncpa [#allocation6], 1
    %494 = vsyncpa [#allocation9], 1
    %495 = vsyncpa [#allocation4], 1
    %496 = vsyncpa [#allocation12], 1

</llo_original>
